<compile_context>
chip_gen: v6e
topology: v6e:2x2x1
jax: 0.10.0
libtpu: 0.0.40
codegen_flags: <defaults>
</compile_context>

<pallas_src>
import functools

import jax
import jax.numpy as jnp
from jax import lax
from jax.experimental import pallas as pl
from jax.experimental.pallas import tpu as pltpu


def _label_smoothing_kernel(pred_ref, target_ref, out_ref, *,
                            smoothing, num_classes, total_rows, tile_b):
    # pred_ref: (tile_b, C) input dtype; target_ref: (tile_b, 1) i32;
    # out_ref: (8, 128) f32 — the tile's partial sum, broadcast lane-dense.
    x = pred_ref[...].astype(jnp.float32)          # per-tile cast, f32 math
    tb, c = x.shape

    confidence = jnp.float32(1.0 - smoothing)
    fill = jnp.float32(smoothing / (num_classes - 1))

    # --- Pass 1 over the tile: row max + weighted sum (both only read x). ---
    col_ids = lax.broadcasted_iota(jnp.int32, (tb, c), 1)
    tgt = target_ref[...]                                        # (tb, 1)
    w = jnp.where(col_ids == tgt, confidence, fill)              # (tb, C)
    weighted = jnp.sum(w * x, axis=-1, keepdims=True)            # (tb, 1)
    m = jnp.max(x, axis=-1, keepdims=True)                       # (tb, 1)

    # --- Pass 2: stable logsumexp (exp + sum). ---
    lse = m + jnp.log(jnp.sum(jnp.exp(x - m), axis=-1, keepdims=True))

    # -sum(true_dist * logp) == lse * sum(w) - sum(w * x) == lse - weighted
    per_row = lse - weighted                                     # (tb, 1)

    # Mask batch-padding rows of the ragged last tile (after per_row is
    # formed: where() discards NaN/inf coming from unspecified padding data).
    row_ids = (pl.program_id(0) * tile_b
               + lax.broadcasted_iota(jnp.int32, (tb, 1), 0))
    per_row = jnp.where(row_ids < total_rows, per_row, 0.0)

    tile_sum = jnp.sum(per_row)

    # Lane-dense (8, 128) store: broadcast the scalar; wrapper reads [0, 0].
    out_ref[...] = jnp.broadcast_to(tile_sum, (8, 128)).astype(jnp.float32)


def _vmem_limit_bytes():
    cap = 128 * 1024 * 1024
    try:
        info = pltpu.get_tpu_info()
        cap = int(getattr(info, "vmem_capacity_bytes", cap))
    except Exception:
        pass
    # Half of physical, capped at 64 MiB: v5e/v6e (128 MiB) -> 64 MiB,
    # v7x (64 MiB per TensorCore) -> 32 MiB.
    return min(64 * 1024 * 1024, cap // 2)


def _choose_tile_rows(batch, classes, dtype, vmem_limit):
    itemsize = jnp.dtype(dtype).itemsize
    sub = max(8, 32 // itemsize)           # sublane multiple: 8 f32, 16 bf16, 32 i8
    if batch <= sub:
        return batch                        # single block equal to the full dim

    # Per-element live bytes: 2x double-buffered input + ~3 f32 temporaries
    # (the f32 cast, the exp temp, and the select/weighted temp).
    bytes_per_elem = 2 * itemsize + 3 * 4
    budget = int(0.75 * vmem_limit)
    t = max(sub, budget // max(1, classes * bytes_per_elem))
    t = (t // sub) * sub
    t = min(t, 2048)                        # per-step row cap

    # Keep >= 2 grid steps so the parallel axis feeds both v7x TensorCores.
    half = -(-batch // 2)
    half = ((half + sub - 1) // sub) * sub
    return max(sub, min(t, half))


def label_smoothing_loss(pred, target, *, smoothing=0.1):
    """Pallas implementation of LabelSmoothingLoss.forward(pred, target)."""
    B, C = pred.shape
    vmem_limit = _vmem_limit_bytes()
    tile_b = _choose_tile_rows(B, C, pred.dtype, vmem_limit)
    num_tiles = pl.cdiv(B, tile_b)          # ragged last block, no HBM pad copy

    target2d = target.astype(jnp.int32).reshape(B, 1)

    kernel = functools.partial(
        _label_smoothing_kernel,
        smoothing=float(smoothing),
        num_classes=int(C),
        total_rows=int(B),
        tile_b=int(tile_b),
    )

    itemsize = jnp.dtype(pred.dtype).itemsize
    cost = pl.CostEstimate(
        flops=int(6 * B * C),
        transcendentals=int(B * C),
        bytes_accessed=int(B * C * itemsize + B * 4 + num_tiles * 8 * 128 * 4),
    )

    partials = pl.pallas_call(
        kernel,
        out_shape=jax.ShapeDtypeStruct((num_tiles * 8, 128), jnp.float32),
        grid_spec=pltpu.PrefetchScalarGridSpec(
            num_scalar_prefetch=0,
            grid=(num_tiles,),
            in_specs=[
                pl.BlockSpec((tile_b, C), lambda i: (i, 0)),   # logits tile
                pl.BlockSpec((tile_b, 1), lambda i: (i, 0)),   # targets tile
            ],
            out_specs=pl.BlockSpec((8, 128), lambda i: (i, 0)),
        ),
        compiler_params=pltpu.CompilerParams(
            dimension_semantics=("parallel",),
            vmem_limit_bytes=int(vmem_limit),
        ),
        cost_estimate=cost,
    )(pred, target2d)

    # One partial per tile lives at [tile*8 + 0, 0]; padded rows contributed
    # exact zeros, so the mean is over the true global batch size.
    per_tile = partials.reshape(num_tiles, 8, 128)[:, 0, 0]
    return jnp.sum(per_tile) / jnp.float32(B)


def _reference(pred, target, *, smoothing, classes):
    logp = jax.nn.log_softmax(pred.astype(jnp.float32), axis=-1)
    fill = smoothing / (classes - 1)
    true_dist = jnp.full_like(logp, fill)
    true_dist = true_dist.at[jnp.arange(pred.shape[0]), target].set(1.0 - smoothing)
    return jnp.mean(jnp.sum(-true_dist * logp, axis=-1))


if __name__ == "__main__":
    B, C = 8, 32          # batch of 8 predictions over 32 classes
    SMOOTHING = 0.1

    key = jax.random.PRNGKey(0)
    k_pred, k_tgt = jax.random.split(key)
    pred = jax.random.normal(k_pred, (B, C), dtype=jnp.float32)
    target = jax.random.randint(k_tgt, (B,), 0, C, dtype=jnp.int32)

    loss = label_smoothing_loss(pred, target, smoothing=SMOOTHING)
    loss = jax.block_until_ready(loss)

    ref = _reference(pred, target, smoothing=SMOOTHING, classes=C)
    assert jnp.allclose(loss, ref, rtol=1e-5, atol=1e-5), (loss, ref)

    print("KERNEL_OK")
</pallas_src>

<mosaic_0001>
module attributes {stable_mosaic.version = 11 : i64} {
  func.func @_label_smoothing_kernel(%arg0: i32, %arg1: memref<8x32xf32, #tpu.memory_space<vmem>>, %arg2: memref<8x1xi32, #tpu.memory_space<vmem>>, %arg3: memref<8x128xf32, #tpu.memory_space<vmem>>) attributes {dimension_semantics = [#tpu.dimension_semantics<parallel>], iteration_bounds = array<i64: 1>, scalar_prefetch = 0 : i64, scratch_operands = 0 : i64, tpu.core_type = #tpu.core_type<tc>, window_params = [{transform_indices = @transform_0, window_bounds = array<i64: 8, 32>}, {transform_indices = @transform_1, window_bounds = array<i64: 8, 1>}, {transform_indices = @transform_2, window_bounds = array<i64: 8, 128>}]} {
    %c0 = arith.constant 0 : index
    %c0_0 = arith.constant 0 : index
    %0 = vector.load %arg1[%c0, %c0_0] : memref<8x32xf32, #tpu.memory_space<vmem>>, vector<8x32xf32>
    %1 = tpu.iota {dimensions = array<i32: 1>} : vector<8x32xi32>
    %c0_1 = arith.constant 0 : index
    %c0_2 = arith.constant 0 : index
    %2 = vector.load %arg2[%c0_1, %c0_2] : memref<8x1xi32, #tpu.memory_space<vmem>>, vector<8x1xi32>
    %3 = vector.broadcast %2 : vector<8x1xi32> to vector<8x32xi32>
    %4 = arith.cmpi eq, %1, %3 : vector<8x32xi32>
    %cst = arith.constant 0.899999976 : f32
    %cst_3 = arith.constant 0.0032258064 : f32
    %5 = vector.broadcast %cst : f32 to vector<8x32xf32>
    %6 = vector.broadcast %cst_3 : f32 to vector<8x32xf32>
    %7 = arith.select %4, %5, %6 : vector<8x32xi1>, vector<8x32xf32>
    %8 = arith.mulf %7, %0 : vector<8x32xf32>
    %cst_4 = arith.constant dense<0.000000e+00> : vector<8xf32>
    %9 = vector.multi_reduction <add>, %8, %cst_4 [1] : vector<8x32xf32> to vector<8xf32>
    %10 = vector.shape_cast %9 : vector<8xf32> to vector<8x1xf32>
    %cst_5 = arith.constant dense<0xFF800000> : vector<8xf32>
    %11 = vector.multi_reduction <maximumf>, %0, %cst_5 [1] : vector<8x32xf32> to vector<8xf32>
    %12 = vector.shape_cast %11 : vector<8xf32> to vector<8x1xf32>
    %13 = vector.broadcast %12 : vector<8x1xf32> to vector<8x32xf32>
    %14 = arith.subf %0, %13 : vector<8x32xf32>
    %15 = math.exp %14 : vector<8x32xf32>
    %cst_6 = arith.constant dense<0.000000e+00> : vector<8xf32>
    %16 = vector.multi_reduction <add>, %15, %cst_6 [1] : vector<8x32xf32> to vector<8xf32>
    %17 = vector.shape_cast %16 : vector<8xf32> to vector<8x1xf32>
    %18 = math.log %17 : vector<8x1xf32>
    %19 = arith.addf %12, %18 : vector<8x1xf32>
    %20 = arith.subf %19, %10 : vector<8x1xf32>
    %c8_i32 = arith.constant 8 : i32
    %21 = arith.muli %arg0, %c8_i32 : i32
    %22 = tpu.iota {dimensions = array<i32: 0>} : vector<8x1xi32>
    %23 = vector.broadcast %21 : i32 to vector<8x1xi32>
    %24 = arith.addi %23, %22 : vector<8x1xi32>
    %c8_i32_7 = arith.constant 8 : i32
    %25 = vector.broadcast %c8_i32_7 : i32 to vector<8x1xi32>
    %26 = arith.cmpi slt, %24, %25 : vector<8x1xi32>
    %cst_8 = arith.constant 0.000000e+00 : f32
    %27 = vector.broadcast %cst_8 : f32 to vector<8x1xf32>
    %28 = arith.select %26, %20, %27 : vector<8x1xi1>, vector<8x1xf32>
    %29 = vector.shape_cast %28 : vector<8x1xf32> to vector<1x8x1xf32>
    %cst_9 = arith.constant dense<0.000000e+00> : vector<1xf32>
    %30 = vector.multi_reduction <add>, %29, %cst_9 [1, 2] : vector<1x8x1xf32> to vector<1xf32>
    %31 = vector.shape_cast %30 : vector<1xf32> to vector<1x1x1xf32>
    %32 = vector.extract %31[0, 0, 0] : f32 from vector<1x1x1xf32>
    %33 = vector.broadcast %32 : f32 to vector<8x128xf32>
    %c0_10 = arith.constant 0 : index
    %c0_11 = arith.constant 0 : index
    %34 = vector.load %arg3[%c0_10, %c0_11] : memref<8x128xf32, #tpu.memory_space<vmem>>, vector<8x128xf32>
    tpu.vector_store %arg3[%c0_10, %c0_11], %33 {strides = array<i32>} : memref<8x128xf32, #tpu.memory_space<vmem>>, vector<8x128xf32>,
    return
  }
  func.func @transform_0(%arg0: i32) -> (i32, i32) {
    %c0_i32 = arith.constant 0 : i32
    %c0_i32_0 = arith.constant 0 : i32
    return %arg0, %c0_i32 : i32, i32
  }
  func.func @transform_1(%arg0: i32) -> (i32, i32) {
    %c0_i32 = arith.constant 0 : i32
    %c0_i32_0 = arith.constant 0 : i32
    return %arg0, %c0_i32 : i32, i32
  }
  func.func @transform_2(%arg0: i32) -> (i32, i32) {
    %c0_i32 = arith.constant 0 : i32
    %c0_i32_0 = arith.constant 0 : i32
    return %arg0, %c0_i32 : i32, i32
  }
}

</mosaic_0001>

<llo_original>
// kernel: tpu_custom_call.1
$region0: #{tpu_custom_call.1}
  #allocation0 [shape = 'u32[]', space=smem, size = 0x4, offset = 0x4, fixed_abs, tag = 'smem constant byte address 0x4 - core index']
  #allocation1 [shape = 'u32[144,128]{1,0:T(1,128)}', space=vmem, size = 0x12000, scoped, tag = 'internal scratch']
  %s0 = inlined_call_operand.vmem [shape: f32[8,32], index: 0, kind: input, shape index: {}]
  %s1 = inlined_call_operand.vmem [shape: s32[8,1], index: 1, kind: input, shape index: {}]
  %s2 = inlined_call_operand.hbm [shape: f32[8,128], index: 2, kind: output, shape index: {}]
  %s3 = sld [smem:[#allocation0]]
  $region18: #{tpu_custom_call.1} parent=0
    _
  %s5 = ssub.s32 1, %s3
  %s6 = scalar_select 0, %s5, %s3
  $region1: #{tpu_custom_call.1} parent=0
    #allocation2 [shape = 'u8[4096]{0}', space=vmem, size = 0x1000, scoped, tag = 'output window, operand 0, single buffered']
    #allocation3 [shape = 's32[1]{0}', space=sflag, size = 0x4, scoped, tag = 'scoped memory for tpu_custom_call.1']
    %7 = vsyncpa [#allocation3], 0
    // Predicated region
    $region2: #{tpu_custom_call.1} parent=1 // pred_check
      _
    $region3: #{tpu_custom_call.1} parent=1 // pred_check_branch
      %9 = sbr.rel (0) target = $region5
    $region4: #{tpu_custom_call.1} parent=1 // pred_region
      _
    $region5: #{tpu_custom_call.1} parent=1 // pred_fallthru
      _
    // Predicated region
    $region6: #{tpu_custom_call.1} parent=1 // pred_check
      _
    $region7: #{tpu_custom_call.1} parent=1 // pred_check_branch
      %11 = sbr.rel (0) target = $region9
    $region8: #{tpu_custom_call.1} parent=1 // pred_region
      _
    $region9: #{tpu_custom_call.1} parent=1 // pred_fallthru
      _
    %v12 = vld [vmem:[%s0] sm:$0xff]
    %v13 = vlaneseq
    %v14 = vand.u32 %v13, 127
    %v15 = vld [vmem:[%s1] sm:$0xff]
    %16 = vset.pattern.permute.xlu0 0
    %17 = vperm.xlu0 %16, %v15
    %v18 = vpop.permute.xlu0 %17
    %vm19 = vcmp.eq.s32.totalorder %v14, %v18
    %v20 = vsel %vm19, 0.9, 0.0032258064
    %v21 = vmul.f32 %v20, %v12
    %vm22 = vcmask 261120
    %v23 = vsel %vm22, %v21, 0.0
    %24 = vadd.xlane.f32.xlu0 %v23
    %v25 = vpop.xlane.xlu0 %24
    %v26 = vsel %vm22, %v12, -inf
    %27 = vmax.xlane.f32.xlu0 %v26
    %v28 = vpop.xlane.xlu0 %27
    %v29 = vsub.f32 %v12, %v28
    %v30 = vmul.f32 %v29, 1.442695
    %v31 = vpow.pop %v30
    %v32 = vsel %vm22, %v31, 0.0
    %33 = vadd.xlane.f32.xlu0 %v32
    %v34 = vpop.xlane.xlu0 %33
    %v35 = vlog2.pop %v34
    %v36 = vmul.f32 %v35, 0.6931472
    %v37 = vadd.f32 %v28, %v36
    %v38 = vsub.f32 %v37, %v25
    %s39 = smul.u32 0, 8
    %v40 = vlaneseq
    %v41 = vshrl.u32 %v40, 7
    %v42 = vstv %s39
    %v43 = vadd.s32 %v42, %v41
    %vm44 = vcmp.lt.s32.totalorder %v43, 8
    %v45 = vsel %vm44, %v38, 0.0
    %vm46 = vcmask 7168
    %v47 = vsel %vm46, %v45, 0.0
    %48 = vadd.xlane.f32.xlu0 %v47
    %v49 = vpop.xlane.xlu0 %48
    %v50 = vrot.slane %v49, 4
    %v51 = vadd.f32 %v49, %v50
    %v52 = vrot.slane %v51, 2
    %v53 = vadd.f32 %v51, %v52
    %v54 = vrot.slane %v53, 1
    %v55 = vadd.f32 %v53, %v54
    %s56 = vtos %v55
    %v57 = vstv %s56
    %58 = vst [vmem:[#allocation2] sm:$0xff] %v57
    // Predicated region
    $region10: #{tpu_custom_call.1} parent=1 // pred_check
      _
    $region11: #{tpu_custom_call.1} parent=1 // pred_check_branch
      %60 = sbr.rel (0) target = $region13
    $region12: #{tpu_custom_call.1} parent=1 // pred_region
      %s62 = ssub.s32 128, 128
      %63 = vsyncadd [#allocation3], %s62
      %s65 = sshll.u32 [#allocation2], 4
      %s66 = int_to_ptr.vmem [resolvable:$true] %s65
      %68 = dma.vmem_to_hbm [thread:$0]  %s66, 128, %s2, [#allocation3]
    $region13: #{tpu_custom_call.1} parent=1 // pred_fallthru
      _
    // Predicated region
    $region14: #{tpu_custom_call.1} parent=1 // pred_check
      _
    $region15: #{tpu_custom_call.1} parent=1 // pred_check_branch
      %70 = sbr.rel (0) target = $region17
    $region16: #{tpu_custom_call.1} parent=1 // pred_region
      %71 = dma.done [#allocation3], 128
    $region17: #{tpu_custom_call.1} parent=1 // pred_fallthru
      _
    %72 = vsyncpa [#allocation3], 1

</llo_original>
